<compile_context>
chip_gen: v7x
topology: tpu7x:2x2x1
jax: 0.10.0
libtpu: 0.0.40
codegen_flags: <defaults>
</compile_context>

<pallas_src>
import math

import jax
import jax.numpy as jnp
from jax.experimental import pallas as pl
from jax.experimental.pallas import tpu as pltpu


def _round_up(v: int, m: int) -> int:
    return ((v + m - 1) // m) * m


def _erf(v):
    # Abramowitz & Stegun 7.1.26 polynomial (max abs err ~1.5e-7): uses only
    # ops guaranteed to lower on Mosaic (abs/exp/mul/add/div/where).
    a1, a2, a3, a4, a5 = 0.254829592, -0.284496736, 1.421413741, -1.453152027, 1.061405429
    p = 0.3275911
    sign = jnp.where(v >= 0.0, 1.0, -1.0)
    av = jnp.abs(v)
    t = 1.0 / (1.0 + p * av)
    poly = ((((a5 * t + a4) * t + a3) * t + a2) * t + a1) * t
    return sign * (1.0 - poly * jnp.exp(-av * av))


_INV_SQRT2 = 1.0 / math.sqrt(2.0)


def _gelu_exact(h):
    # Exact (erf-based) GELU, matching torch.nn.GELU() default.
    return 0.5 * h * (1.0 + _erf(h * _INV_SQRT2))


# --------------------------------------------------------------------------
# 1) Router kernel
# --------------------------------------------------------------------------
def _make_router_kernel(num_experts: int, active_experts: int):
    def router_kernel(x_ref, wr_ref, br_ref, w_ref):
        x = x_ref[...].astype(jnp.float32)                          # (TN, C)  bf16 -> f32
        logits = jnp.dot(x, wr_ref[...],
                         preferred_element_type=jnp.float32) + br_ref[...]
        logits = logits - jnp.max(logits, axis=-1, keepdims=True)
        p = jnp.exp(logits)
        scores = p / jnp.sum(p, axis=-1, keepdims=True)             # (TN, E)

        # top-k mask (iterative arg-max, first-index tie-break like torch.topk)
        col = jax.lax.broadcasted_iota(jnp.int32, scores.shape, 1)
        work = scores
        mask = jnp.zeros(scores.shape, dtype=jnp.bool_)
        for _ in range(active_experts):
            row_max = jnp.max(work, axis=-1, keepdims=True)
            is_max = work >= row_max
            idx = jnp.min(jnp.where(is_max, col, num_experts),
                          axis=-1, keepdims=True)
            sel = col == idx
            mask = jnp.logical_or(mask, sel)
            work = jnp.where(sel, -jnp.inf, work)

        # renormalize selected probabilities (softmax over masked scores, as in
        # the reference).  Unselected entries become exactly 0.
        masked = jnp.where(mask, scores, -jnp.inf)
        masked = masked - jnp.max(masked, axis=-1, keepdims=True)
        pm = jnp.exp(masked)
        w_ref[...] = pm / jnp.sum(pm, axis=-1, keepdims=True)

    return router_kernel


def router_forward(x2, wr, br, *, num_experts, active_experts, tile_r):
    """x2: (N, C) bf16 tokens. Returns renormalized routing weights (N, E) f32."""
    N, C = x2.shape
    E = num_experts
    n_pad = _round_up(N, tile_r)
    if n_pad != N:
        x2 = jnp.pad(x2, ((0, n_pad - N), (0, 0)))

    weights = pl.pallas_call(
        _make_router_kernel(num_experts, active_experts),
        out_shape=jax.ShapeDtypeStruct((n_pad, E), jnp.float32),
        grid_spec=pltpu.PrefetchScalarGridSpec(
            num_scalar_prefetch=0,
            grid=(n_pad // tile_r,),
            in_specs=[
                pl.BlockSpec((tile_r, C), lambda i: (i, 0)),
                pl.BlockSpec((C, E), lambda i: (0, 0)),
                pl.BlockSpec((1, E), lambda i: (0, 0)),
            ],
            out_specs=pl.BlockSpec((tile_r, E), lambda i: (i, 0)),
        ),
        compiler_params=pltpu.CompilerParams(
            dimension_semantics=("parallel",),
            vmem_limit_bytes=32 * 1024 * 1024,
        ),
    )(x2, wr, br)
    return weights[:N]


# --------------------------------------------------------------------------
# 3) Grouped expert-FFN kernel (one expert per token tile, scalar-prefetched id)
# --------------------------------------------------------------------------
def _expert_ffn_kernel(te_ref, x_ref, rw_ref, w1_ref, b1_ref, w2_ref, b2_ref, y_ref):
    del te_ref  # only used by the index_maps
    x = x_ref[...]                                                  # (TG, C) bf16
    h = jnp.dot(x, w1_ref[0], preferred_element_type=jnp.float32) + b1_ref[0]
    h = _gelu_exact(h)                                              # f32 exact GELU
    y = jnp.dot(h.astype(jnp.bfloat16), w2_ref[0],
                preferred_element_type=jnp.float32) + b2_ref[0]     # (TG, C) f32
    y = jnp.where(jnp.isnan(y), 0.0, y)                             # nan -> 0 as in ref
    y_ref[...] = rw_ref[...] * y                                    # scale by routing weight


def sparse_moe_forward(x, params, *, num_experts, active_experts,
                       tile_n=None, vmem_limit_bytes=48 * 1024 * 1024):
    """x: (B, T, C). Returns (B, T, C)."""
    B, T, C = x.shape
    N = B * T
    E, K = num_experts, active_experts

    wr = params["wr"].astype(jnp.float32)     # (C, E)
    br = params["br"].astype(jnp.float32)     # (1, E)
    w1 = params["w1"].astype(jnp.bfloat16)    # (E, C, H)  bf16 MXU operand
    b1 = params["b1"].astype(jnp.float32)     # (E, 1, H)
    w2 = params["w2"].astype(jnp.bfloat16)    # (E, H, C)  bf16 MXU operand
    b2 = params["b2"].astype(jnp.float32)     # (E, 1, C)
    assert w1.shape[0] == E
    H = w1.shape[2]

    # bf16 token rows: halves x HBM traffic / VMEM; router upcasts in-kernel.
    x2 = x.reshape(N, C).astype(jnp.bfloat16)

    # Tile sizes: 256 rows is at/above the v5e roofline and plenty everywhere
    # once weights stop being re-streamed (grouped dispatch visits each expert's
    # weights once).  Clip for tiny inputs; keep a multiple of 8 (sublane).
    if tile_n is None:
        tile_n = 256
    tile_r = min(tile_n, _round_up(N, 8))
    tile_g = min(tile_n, max(8, _round_up(-(-(N * K) // E), 8)))

    # ---- 1) router ---------------------------------------------------------
    weights = router_forward(x2, wr, br, num_experts=E, active_experts=K,
                             tile_r=tile_r)                          # (N, E) f32

    # ---- 2) grouped dispatch (JAX glue: sort (token, expert) pairs) --------
    top_w, top_idx = jax.lax.top_k(weights, K)        # exactly the K experts with weight > 0
    expert_pair = top_idx.reshape(N * K).astype(jnp.int32)
    token_pair = jnp.broadcast_to(
        jnp.arange(N, dtype=jnp.int32)[:, None], (N, K)).reshape(N * K)
    weight_pair = top_w.reshape(N * K)

    order = jnp.argsort(expert_pair)
    se = expert_pair[order]                            # sorted expert ids
    st = token_pair[order]                             # sorted source token ids
    sw = weight_pair[order]                            # sorted routing weights

    counts = jnp.sum((expert_pair[:, None] ==
                      jnp.arange(E, dtype=jnp.int32)[None, :]).astype(jnp.int32), axis=0)
    padded = ((counts + tile_g - 1) // tile_g) * tile_g        # tile-aligned group sizes
    ends = jnp.cumsum(padded).astype(jnp.int32)
    starts = (ends - padded).astype(jnp.int32)
    raw_starts = (jnp.cumsum(counts) - counts).astype(jnp.int32)

    rank = jnp.arange(N * K, dtype=jnp.int32) - raw_starts[se]
    dest = (starts[se] + rank).astype(jnp.int32)               # row in padded sorted buffer

    R = _round_up(N * K + E * (tile_g - 1), tile_g)            # static upper bound on rows
    n_tiles = R // tile_g
    tile_expert = jnp.clip(
        jnp.searchsorted(ends, jnp.arange(n_tiles, dtype=jnp.int32) * tile_g, side="right"),
        0, E - 1).astype(jnp.int32)

    x_sorted = jnp.zeros((R, C), jnp.bfloat16).at[dest].set(x2[st])
    w_sorted = jnp.zeros((R, 1), jnp.float32).at[dest].set(sw[:, None])
    tok_row = jnp.full((R,), N, jnp.int32).at[dest].set(st)    # padding rows -> dummy row N

    # ---- 3) grouped expert FFN (Pallas) ------------------------------------
    y_sorted = pl.pallas_call(
        _expert_ffn_kernel,
        out_shape=jax.ShapeDtypeStruct((R, C), jnp.float32),
        grid_spec=pltpu.PrefetchScalarGridSpec(
            num_scalar_prefetch=1,                     # tile_expert -> SMEM, used by index_maps
            grid=(n_tiles,),
            in_specs=[
                pl.BlockSpec((tile_g, C), lambda i, te: (i, 0)),       # routed token rows
                pl.BlockSpec((tile_g, 1), lambda i, te: (i, 0)),       # routing weight per row
                pl.BlockSpec((1, C, H), lambda i, te: (te[i], 0, 0)),  # W1 of this tile's expert
                pl.BlockSpec((1, 1, H), lambda i, te: (te[i], 0, 0)),  # b1
                pl.BlockSpec((1, H, C), lambda i, te: (te[i], 0, 0)),  # W2
                pl.BlockSpec((1, 1, C), lambda i, te: (te[i], 0, 0)),  # b2
            ],
            out_specs=pl.BlockSpec((tile_g, C), lambda i, te: (i, 0)),
        ),
        compiler_params=pltpu.CompilerParams(
            dimension_semantics=("parallel",),
            vmem_limit_bytes=vmem_limit_bytes,         # safe under v7x's 64 MiB physical VMEM
        ),
    )(tile_expert, x_sorted, w_sorted, w1, b1, w2, b2)

    # ---- 4) weighted combine (scatter-add back to token order) -------------
    out = jnp.zeros((N + 1, C), jnp.float32).at[tok_row].add(y_sorted)[:N]
    return out.astype(x.dtype).reshape(B, T, C)


def init_params(key, embed_size, num_experts):
    """Deterministic init mimicking nn.Linear's uniform(-1/sqrt(fan_in), ...)."""
    C, E, H = embed_size, num_experts, 4 * embed_size
    ks = jax.random.split(key, 6)
    u = lambda k, shape, fan_in: jax.random.uniform(
        k, shape, jnp.float32, -1.0 / math.sqrt(fan_in), 1.0 / math.sqrt(fan_in))
    return {
        "wr": u(ks[0], (C, E), C),        # router weight, stored (in, out)
        "br": u(ks[1], (1, E), C),
        "w1": u(ks[2], (E, C, H), C),     # expert layer1, (in, out)
        "b1": u(ks[3], (E, 1, H), C),
        "w2": u(ks[4], (E, H, C), H),     # expert layer2, (in, out)
        "b2": u(ks[5], (E, 1, C), H),
    }


if __name__ == "__main__":
    # Lane-dense demo shapes: C multiple of 128 so stores are full-lane.
    B, T, C = 2, 8, 128
    NUM_EXPERTS, ACTIVE_EXPERTS = 4, 2

    key = jax.random.PRNGKey(0)
    kx, kp = jax.random.split(key)
    x = jax.random.normal(kx, (B, T, C), jnp.float32)
    params = init_params(kp, C, NUM_EXPERTS)

    out = sparse_moe_forward(
        x, params, num_experts=NUM_EXPERTS, active_experts=ACTIVE_EXPERTS)
    out = jax.block_until_ready(out)
    assert out.shape == (B, T, C)
    assert not bool(jnp.isnan(out).any())

    # Sanity check of dispatch / FFN / combine machinery: dense JAX reference
    # using the kernel's own routing weights and the same bf16 operand policy
    # (tolerance covers accumulation-order differences only).
    N = B * T
    x2 = x.reshape(N, C).astype(jnp.bfloat16)
    wts = router_forward(x2, params["wr"], params["br"],
                         num_experts=NUM_EXPERTS, active_experts=ACTIVE_EXPERTS,
                         tile_r=min(256, _round_up(N, 8)))
    ref = jnp.zeros((N, C), jnp.float32)
    for e in range(NUM_EXPERTS):
        h = jnp.dot(x2, params["w1"][e].astype(jnp.bfloat16),
                    preferred_element_type=jnp.float32) + params["b1"][e]
        h = _gelu_exact(h)
        y = jnp.dot(h.astype(jnp.bfloat16), params["w2"][e].astype(jnp.bfloat16),
                    preferred_element_type=jnp.float32) + params["b2"][e]
        y = jnp.where(jnp.isnan(y), 0.0, y)
        ref = ref + wts[:, e:e + 1] * y
    err = float(jnp.max(jnp.abs(out.reshape(N, C) - ref)))
    assert err < 1e-2, f"max abs err vs reference: {err}"
    print("KERNEL_OK")
</pallas_src>

<mosaic_0001>
module attributes {stable_mosaic.version = 11 : i64} {
  func.func @router_kernel(%arg0: i32, %arg1: memref<16x128xbf16, #tpu.memory_space<vmem>>, %arg2: memref<128x4xf32, #tpu.memory_space<vmem>>, %arg3: memref<1x4xf32, #tpu.memory_space<vmem>>, %arg4: memref<16x4xf32, #tpu.memory_space<vmem>>) attributes {dimension_semantics = [#tpu.dimension_semantics<parallel>], iteration_bounds = array<i64: 1>, scalar_prefetch = 0 : i64, scratch_operands = 0 : i64, tpu.core_type = #tpu.core_type<tc>, window_params = [{transform_indices = @transform_0, window_bounds = array<i64: 16, 128>}, {pipeline_mode = #tpu.pipeline_mode<synchronous>, transform_indices = @transform_1, window_bounds = array<i64: 128, 4>}, {pipeline_mode = #tpu.pipeline_mode<synchronous>, transform_indices = @transform_2, window_bounds = array<i64: 1, 4>}, {transform_indices = @transform_3, window_bounds = array<i64: 16, 4>}]} {
    %c0 = arith.constant 0 : index
    %c0_0 = arith.constant 0 : index
    %0 = vector.load %arg1[%c0, %c0_0] : memref<16x128xbf16, #tpu.memory_space<vmem>>, vector<16x128xbf16>
    %1 = arith.extf %0 : vector<16x128xbf16> to vector<16x128xf32>
    %c0_1 = arith.constant 0 : index
    %c0_2 = arith.constant 0 : index
    %2 = vector.load %arg2[%c0_1, %c0_2] : memref<128x4xf32, #tpu.memory_space<vmem>>, vector<128x4xf32>
    %cst = arith.constant dense<0.000000e+00> : vector<16x4xf32>
    %3 = tpu.matmul %1, %2, %cst {dimension_numbers = #tpu.dot_dimension_numbers<[1], [0], [0], [1], [0, 0, 1, 1], [], []>} : vector<16x128xf32>, vector<128x4xf32>, vector<16x4xf32> -> vector<16x4xf32>
    %c0_3 = arith.constant 0 : index
    %c0_4 = arith.constant 0 : index
    %4 = vector.load %arg3[%c0_3, %c0_4] : memref<1x4xf32, #tpu.memory_space<vmem>>, vector<1x4xf32>
    %5 = vector.broadcast %4 : vector<1x4xf32> to vector<16x4xf32>
    %6 = arith.addf %3, %5 : vector<16x4xf32>
    %cst_5 = arith.constant dense<0xFF800000> : vector<16xf32>
    %7 = vector.multi_reduction <maximumf>, %6, %cst_5 [1] : vector<16x4xf32> to vector<16xf32>
    %8 = vector.shape_cast %7 : vector<16xf32> to vector<16x1xf32>
    %9 = vector.broadcast %8 : vector<16x1xf32> to vector<16x4xf32>
    %10 = arith.subf %6, %9 : vector<16x4xf32>
    %11 = math.exp %10 : vector<16x4xf32>
    %cst_6 = arith.constant dense<0.000000e+00> : vector<16xf32>
    %12 = vector.multi_reduction <add>, %11, %cst_6 [1] : vector<16x4xf32> to vector<16xf32>
    %13 = vector.shape_cast %12 : vector<16xf32> to vector<16x1xf32>
    %14 = vector.broadcast %13 : vector<16x1xf32> to vector<16x4xf32>
    %15 = arith.divf %11, %14 : vector<16x4xf32>
    %16 = tpu.iota {dimensions = array<i32: 1>} : vector<16x4xi32>
    %false = arith.constant false
    %17 = vector.broadcast %false : i1 to vector<16x4xi1>
    %cst_7 = arith.constant dense<0xFF800000> : vector<16xf32>
    %18 = vector.multi_reduction <maximumf>, %15, %cst_7 [1] : vector<16x4xf32> to vector<16xf32>
    %19 = vector.shape_cast %18 : vector<16xf32> to vector<16x1xf32>
    %20 = vector.broadcast %19 : vector<16x1xf32> to vector<16x4xf32>
    %21 = arith.cmpf oge, %15, %20 : vector<16x4xf32>
    %c4_i32 = arith.constant 4 : i32
    %22 = vector.broadcast %c4_i32 : i32 to vector<16x4xi32>
    %23 = arith.select %21, %16, %22 : vector<16x4xi1>, vector<16x4xi32>
    %cst_8 = arith.constant dense<2147483647> : vector<16xi32>
    %24 = vector.multi_reduction <minsi>, %23, %cst_8 [1] : vector<16x4xi32> to vector<16xi32>
    %25 = vector.shape_cast %24 : vector<16xi32> to vector<16x1xi32>
    %26 = vector.broadcast %25 : vector<16x1xi32> to vector<16x4xi32>
    %27 = arith.cmpi eq, %16, %26 : vector<16x4xi32>
    %28 = arith.ori %17, %27 : vector<16x4xi1>
    %cst_9 = arith.constant 0xFF800000 : f32
    %29 = vector.broadcast %cst_9 : f32 to vector<16x4xf32>
    %30 = arith.select %27, %29, %15 : vector<16x4xi1>, vector<16x4xf32>
    %cst_10 = arith.constant dense<0xFF800000> : vector<16xf32>
    %31 = vector.multi_reduction <maximumf>, %30, %cst_10 [1] : vector<16x4xf32> to vector<16xf32>
    %32 = vector.shape_cast %31 : vector<16xf32> to vector<16x1xf32>
    %33 = vector.broadcast %32 : vector<16x1xf32> to vector<16x4xf32>
    %34 = arith.cmpf oge, %30, %33 : vector<16x4xf32>
    %c4_i32_11 = arith.constant 4 : i32
    %35 = vector.broadcast %c4_i32_11 : i32 to vector<16x4xi32>
    %36 = arith.select %34, %16, %35 : vector<16x4xi1>, vector<16x4xi32>
    %cst_12 = arith.constant dense<2147483647> : vector<16xi32>
    %37 = vector.multi_reduction <minsi>, %36, %cst_12 [1] : vector<16x4xi32> to vector<16xi32>
    %38 = vector.shape_cast %37 : vector<16xi32> to vector<16x1xi32>
    %39 = vector.broadcast %38 : vector<16x1xi32> to vector<16x4xi32>
    %40 = arith.cmpi eq, %16, %39 : vector<16x4xi32>
    %41 = arith.ori %28, %40 : vector<16x4xi1>
    %cst_13 = arith.constant 0xFF800000 : f32
    %42 = vector.broadcast %cst_13 : f32 to vector<16x4xf32>
    %43 = arith.select %41, %15, %42 : vector<16x4xi1>, vector<16x4xf32>
    %cst_14 = arith.constant dense<0xFF800000> : vector<16xf32>
    %44 = vector.multi_reduction <maximumf>, %43, %cst_14 [1] : vector<16x4xf32> to vector<16xf32>
    %45 = vector.shape_cast %44 : vector<16xf32> to vector<16x1xf32>
    %46 = vector.broadcast %45 : vector<16x1xf32> to vector<16x4xf32>
    %47 = arith.subf %43, %46 : vector<16x4xf32>
    %48 = math.exp %47 : vector<16x4xf32>
    %cst_15 = arith.constant dense<0.000000e+00> : vector<16xf32>
    %49 = vector.multi_reduction <add>, %48, %cst_15 [1] : vector<16x4xf32> to vector<16xf32>
    %50 = vector.shape_cast %49 : vector<16xf32> to vector<16x1xf32>
    %51 = vector.broadcast %50 : vector<16x1xf32> to vector<16x4xf32>
    %52 = arith.divf %48, %51 : vector<16x4xf32>
    %c0_16 = arith.constant 0 : index
    %c0_17 = arith.constant 0 : index
    %53 = vector.load %arg4[%c0_16, %c0_17] : memref<16x4xf32, #tpu.memory_space<vmem>>, vector<16x4xf32>
    tpu.vector_store %arg4[%c0_16, %c0_17], %52 {strides = array<i32>} : memref<16x4xf32, #tpu.memory_space<vmem>>, vector<16x4xf32>,
    return
  }
  func.func @transform_0(%arg0: i32) -> (i32, i32) {
    %c0_i32 = arith.constant 0 : i32
    %c0_i32_0 = arith.constant 0 : i32
    return %arg0, %c0_i32 : i32, i32
  }
  func.func @transform_1(%arg0: i32) -> (i32, i32) {
    %c0_i32 = arith.constant 0 : i32
    %c0_i32_0 = arith.constant 0 : i32
    %c0_i32_1 = arith.constant 0 : i32
    return %c0_i32, %c0_i32_0 : i32, i32
  }
  func.func @transform_2(%arg0: i32) -> (i32, i32) {
    %c0_i32 = arith.constant 0 : i32
    %c0_i32_0 = arith.constant 0 : i32
    %c0_i32_1 = arith.constant 0 : i32
    return %c0_i32, %c0_i32_0 : i32, i32
  }
  func.func @transform_3(%arg0: i32) -> (i32, i32) {
    %c0_i32 = arith.constant 0 : i32
    %c0_i32_0 = arith.constant 0 : i32
    return %arg0, %c0_i32 : i32, i32
  }
}

</mosaic_0001>

<llo_original>
// kernel: tpu_custom_call.1
$region0: #{tpu_custom_call.1}
  #allocation0 [shape = 'u32[]', space=smem, size = 0x4, offset = 0x4, fixed_abs, tag = 'smem constant byte address 0x4 - core index']
  #allocation1 [shape = 'u32[144,128]{1,0:T(1,128)}', space=vmem, size = 0x12000, scoped, tag = 'internal scratch']
  %s0 = inlined_call_operand.vmem [shape: bf16[16,128], index: 0, kind: input, shape index: {}]
  %s1 = inlined_call_operand.vmem [shape: f32[128,4], index: 1, kind: input, shape index: {}]
  %s2 = inlined_call_operand.vmem [shape: f32[1,4], index: 2, kind: input, shape index: {}]
  %s3 = inlined_call_operand.vmem [shape: f32[16,4], index: 3, kind: output, shape index: {}]
  %s4 = sld [smem:[#allocation0]]
  $region22: #{tpu_custom_call.1} parent=0
    _
  %s6 = ssub.s32 1, %s4
  %s7 = scalar_select 0, %s6, %s4
  // Predicated region
  $region2: #{tpu_custom_call.1} parent=0 // pred_check
    _
  $region3: #{tpu_custom_call.1} parent=0 // pred_check_branch
    %9 = sbr.rel (0) target = $region5
  $region4: #{tpu_custom_call.1} parent=0 // pred_region
    _
  $region5: #{tpu_custom_call.1} parent=0 // pred_fallthru
    _
  // Predicated region
  $region6: #{tpu_custom_call.1} parent=0 // pred_check
    _
  $region7: #{tpu_custom_call.1} parent=0 // pred_check_branch
    %11 = sbr.rel (0) target = $region9
  $region8: #{tpu_custom_call.1} parent=0 // pred_region
    _
  $region9: #{tpu_custom_call.1} parent=0 // pred_fallthru
    _
  // Predicated region
  $region10: #{tpu_custom_call.1} parent=0 // pred_check
    _
  $region11: #{tpu_custom_call.1} parent=0 // pred_check_branch
    %13 = sbr.rel (0) target = $region13
  $region12: #{tpu_custom_call.1} parent=0 // pred_region
    _
  $region13: #{tpu_custom_call.1} parent=0 // pred_fallthru
    _
  %v14 = vld [vmem:[%s0] sm:$0xf]
  %v15 = vld [vmem:[%s0 + $0x4] sm:$0xf]
  %v16 = vunpack.c.l.bf16 %v14
  %v17 = vunpack.c.l.bf16 %v15
  %v18 = vld [vmem:[%s1] sm:$0xff]
  %v19 = vld [vmem:[%s1 + $0x8] sm:$0xff]
  %v20 = vld [vmem:[%s1 + $0x10] sm:$0xff]
  %v21 = vld [vmem:[%s1 + $0x18] sm:$0xff]
  %v22 = vld [vmem:[%s1 + $0x20] sm:$0xff]
  %v23 = vld [vmem:[%s1 + $0x28] sm:$0xff]
  %v24 = vld [vmem:[%s1 + $0x30] sm:$0xff]
  %v25 = vld [vmem:[%s1 + $0x38] sm:$0xff]
  %v26 = vld [vmem:[%s1 + $0x40] sm:$0xff]
  %v27 = vld [vmem:[%s1 + $0x48] sm:$0xff]
  %v28 = vld [vmem:[%s1 + $0x50] sm:$0xff]
  %v29 = vld [vmem:[%s1 + $0x58] sm:$0xff]
  %v30 = vld [vmem:[%s1 + $0x60] sm:$0xff]
  %v31 = vld [vmem:[%s1 + $0x68] sm:$0xff]
  %v32 = vld [vmem:[%s1 + $0x70] sm:$0xff]
  %v33 = vld [vmem:[%s1 + $0x78] sm:$0xff]
  %v34 = vld [vmem:[%s2] sm:$0x1]
  %v36 = vlaneseq
  %v37 = vshrl.u32 %v36, 7
  %v38 = vsub.s32 0, %v37
  %v39 = vrot.slane %v34, %v38
  %41 = vmatprep.subr.mxu0 0.0
  %42 = vmatpush1.msra.mxu0 %v18
  %43 = vmatprep.subr.mxu0 0.0
  %44 = vmatpush1.msra.mxu0 %v19
  %45 = vmatprep.subr.mxu0 0.0
  %46 = vmatpush1.msra.mxu0 %v20
  %47 = vmatprep.subr.mxu0 0.0
  %48 = vmatpush1.msra.mxu0 %v21
  %49 = vmatprep.subr.mxu0 0.0
  %50 = vmatpush1.msra.mxu0 %v22
  %51 = vmatprep.subr.mxu0 0.0
  %52 = vmatpush1.msra.mxu0 %v23
  %53 = vmatprep.subr.mxu0 0.0
  %54 = vmatpush1.msra.mxu0 %v24
  %55 = vmatprep.subr.mxu0 0.0
  %56 = vmatpush1.msra.mxu0 %v25
  %57 = vmatprep.subr.mxu0 0.0
  %58 = vmatpush1.msra.mxu0 %v26
  %59 = vmatprep.subr.mxu0 0.0
  %60 = vmatpush1.msra.mxu0 %v27
  %61 = vmatprep.subr.mxu0 0.0
  %62 = vmatpush1.msra.mxu0 %v28
  %63 = vmatprep.subr.mxu0 0.0
  %64 = vmatpush1.msra.mxu0 %v29
  %65 = vmatprep.subr.mxu0 0.0
  %66 = vmatpush1.msra.mxu0 %v30
  %67 = vmatprep.subr.mxu0 0.0
  %68 = vmatpush1.msra.mxu0 %v31
  %69 = vmatprep.subr.mxu0 0.0
  %70 = vmatpush1.msra.mxu0 %v32
  %71 = vmatprep.subr.mxu0 0.0
  %72 = vmatpush1.msra.mxu0 %v33
  %73 = vmatprep.subr.mxu0 0.0
  %74 = vmatpush1.msra.mxu0 0.0
  %75 = vmatprep.subr.mxu0 0.0
  %76 = vmatpush1.msra.mxu0 0.0
  %77 = vmatprep.subr.mxu0 0.0
  %78 = vmatpush1.msra.mxu0 0.0
  %79 = vmatprep.subr.mxu0 0.0
  %80 = vmatpush1.msra.mxu0 0.0
  %81 = vmatprep.subr.mxu0 0.0
  %82 = vmatpush1.msra.mxu0 0.0
  %83 = vmatprep.subr.mxu0 0.0
  %84 = vmatpush1.msra.mxu0 0.0
  %85 = vmatprep.subr.mxu0 0.0
  %86 = vmatpush1.msra.mxu0 0.0
  %87 = vmatprep.subr.mxu0 0.0
  %88 = vmatpush1.msra.mxu0 0.0
  %89 = vmatprep.subr.mxu0 0.0
  %90 = vmatpush1.msra.mxu0 0.0
  %91 = vmatprep.subr.mxu0 0.0
  %92 = vmatpush1.msra.mxu0 0.0
  %93 = vmatprep.subr.mxu0 0.0
  %94 = vmatpush1.msra.mxu0 0.0
  %95 = vmatprep.subr.mxu0 0.0
  %96 = vmatpush1.msra.mxu0 0.0
  %97 = vmatprep.subr.mxu0 0.0
  %98 = vmatpush1.msra.mxu0 0.0
  %99 = vmatprep.subr.mxu0 0.0
  %100 = vmatpush1.msra.mxu0 0.0
  %101 = vmatprep.subr.mxu0 0.0
  %102 = vmatpush1.msra.mxu0 0.0
  %103 = vmatprep.subr.mxu0 0.0
  %104 = vmatpush1.msra.mxu0 0.0
  %105 = vmatprep.mubr.f32.mxu0 0.0
  %106 = vmatmul.mubr.f32.gmra.mrb[0].mxu0 %v16
  %v107 = vpop.f32.mrb[0].mxu0
  %v108 = vadd.f32 %v39, %v107
  %v109 = vpop.f32.mrb[0].mxu0
  %110 = vmatprep.mubr.f32.mxu0 0.0
  %111 = vmatmul.mubr.f32.gmra.mrb[0].mxu0 %v17
  %v112 = vpop.f32.mrb[0].mxu0
  %v113 = vadd.f32 %v39, %v112
  %v114 = vpop.f32.mrb[0].mxu0
  %115 = vdwg.mxu0
  %vm116 = vcmask 31744
  %v117 = vsel %vm116, %v108, -inf
  %118 = vmax.xlane.f32.xlu0 %v117
  %v119 = vpop.xlane.xlu0 %118
  %v120 = vsel %vm116, %v113, -inf
  %121 = vmax.xlane.f32.xlu0 %v120
  %v122 = vpop.xlane.xlu0 %121
  %v123 = vsub.f32 %v108, %v119
  %v124 = vsub.f32 %v113, %v122
  %v125 = vmul.f32 %v123, 1.442695
  %v126 = vpow.pop %v125
  %v127 = vmul.f32 %v124, 1.442695
  %v128 = vpow.pop %v127
  %v129 = vsel %vm116, %v126, 0.0
  %130 = vadd.xlane.f32.xlu0 %v129
  %v131 = vpop.xlane.xlu0 %130
  %v132 = vsel %vm116, %v128, 0.0
  %133 = vadd.xlane.f32.xlu0 %v132
  %v134 = vpop.xlane.xlu0 %133
  %v135 = vrcp.pop %v131
  %v136 = vmul.f32 %v126, %v135
  %v137 = vrcp.pop %v134
  %v138 = vmul.f32 %v128, %v137
  %v139 = vlaneseq
  %v140 = vand.u32 %v139, 127
  %v141 = vsel %vm116, %v136, -inf
  %142 = vmax.xlane.f32.xlu0 %v141
  %v143 = vpop.xlane.xlu0 %142
  %v144 = vsel %vm116, %v138, -inf
  %145 = vmax.xlane.f32.xlu0 %v144
  %v146 = vpop.xlane.xlu0 %145
  %vm147 = vcmp.ge.f32.partialorder %v136, %v143
  %vm148 = vcmp.ge.f32.partialorder %v138, %v146
  %v149 = vsel %vm147, %v140, 4
  %v150 = vsel %vm148, %v140, 4
  %v151 = vsel %vm116, %v149, 2147483647
  %v152 = vand.u32 %v151, 65535
  %v153 = vshra.s32 %v151, 16
  %v154 = vcvt.s32.f32 %v152
  %v155 = vcvt.s32.f32 %v153
  %156 = vmin.xlane.f32.xlu0 %v155
  %v157 = vpop.xlane.xlu0 %156
  %vm158 = vcmp.eq.f32.partialorder %v155, %v157
  %v159 = vsel %vm158, %v154, inf
  %160 = vmin.xlane.f32.xlu0 %v159
  %v161 = vpop.xlane.xlu0 %160
  %v162 = vcvt.f32.s32 %v161
  %v163 = vcvt.f32.s32 %v157
  %v164 = vshll.u32 %v163, 16
  %v165 = vadd.s32 %v164, %v162
  %v166 = vsel %vm116, %v150, 2147483647
  %v167 = vand.u32 %v166, 65535
  %v168 = vshra.s32 %v166, 16
  %v169 = vcvt.s32.f32 %v167
  %v170 = vcvt.s32.f32 %v168
  %171 = vmin.xlane.f32.xlu0 %v170
  %v172 = vpop.xlane.xlu0 %171
  %vm173 = vcmp.eq.f32.partialorder %v170, %v172
  %v174 = vsel %vm173, %v169, inf
  %175 = vmin.xlane.f32.xlu0 %v174
  %v176 = vpop.xlane.xlu0 %175
  %v177 = vcvt.f32.s32 %v176
  %v178 = vcvt.f32.s32 %v172
  %v179 = vshll.u32 %v178, 16
  %v180 = vadd.s32 %v179, %v177
  %vm181 = vcmp.eq.s32.totalorder %v140, %v165
  %vm182 = vcmp.eq.s32.totalorder %v140, %v180
  %v183 = vsel %vm181, -inf, %v136
  %v184 = vsel %vm182, -inf, %v138
  %v185 = vsel %vm116, %v183, -inf
  %186 = vmax.xlane.f32.xlu0 %v185
  %v187 = vpop.xlane.xlu0 %186
  %v188 = vsel %vm116, %v184, -inf
  %189 = vmax.xlane.f32.xlu0 %v188
  %v190 = vpop.xlane.xlu0 %189
  %vm191 = vcmp.ge.f32.partialorder %v183, %v187
  %vm192 = vcmp.ge.f32.partialorder %v184, %v190
  %v193 = vsel %vm191, %v140, 4
  %v194 = vsel %vm192, %v140, 4
  %v195 = vsel %vm116, %v193, 2147483647
  %v196 = vand.u32 %v195, 65535
  %v197 = vshra.s32 %v195, 16
  %v198 = vcvt.s32.f32 %v196
  %v199 = vcvt.s32.f32 %v197
  %200 = vmin.xlane.f32.xlu0 %v199
  %v201 = vpop.xlane.xlu0 %200
  %vm202 = vcmp.eq.f32.partialorder %v199, %v201
  %v203 = vsel %vm202, %v198, inf
  %204 = vmin.xlane.f32.xlu0 %v203
  %v205 = vpop.xlane.xlu0 %204
  %v206 = vcvt.f32.s32 %v205
  %v207 = vcvt.f32.s32 %v201
  %v208 = vshll.u32 %v207, 16
  %v209 = vadd.s32 %v208, %v206
  %v210 = vsel %vm116, %v194, 2147483647
  %v211 = vand.u32 %v210, 65535
  %v212 = vshra.s32 %v210, 16
  %v213 = vcvt.s32.f32 %v211
  %v214 = vcvt.s32.f32 %v212
  %215 = vmin.xlane.f32.xlu0 %v214
  %v216 = vpop.xlane.xlu0 %215
  %vm217 = vcmp.eq.f32.partialorder %v214, %v216
  %v218 = vsel %vm217, %v213, inf
  %219 = vmin.xlane.f32.xlu0 %v218
  %v220 = vpop.xlane.xlu0 %219
  %v221 = vcvt.f32.s32 %v220
  %v222 = vcvt.f32.s32 %v216
  %v223 = vshll.u32 %v222, 16
  %v224 = vadd.s32 %v223, %v221
  %vm225 = vcmp.eq.s32.totalorder %v140, %v209
  %vm226 = vcmp.eq.s32.totalorder %v140, %v224
  %vm227 = vmor %vm181, %vm225
  %vm228 = vmor %vm182, %vm226
  %v229 = vsel %vm227, %v136, -inf
  %v230 = vsel %vm228, %v138, -inf
  %v231 = vsel %vm116, %v229, -inf
  %232 = vmax.xlane.f32.xlu0 %v231
  %v233 = vpop.xlane.xlu0 %232
  %v234 = vsel %vm116, %v230, -inf
  %235 = vmax.xlane.f32.xlu0 %v234
  %v236 = vpop.xlane.xlu0 %235
  %v237 = vsub.f32 %v229, %v233
  %v238 = vsub.f32 %v230, %v236
  %v239 = vmul.f32 %v237, 1.442695
  %v240 = vpow.pop %v239
  %v241 = vmul.f32 %v238, 1.442695
  %v242 = vpow.pop %v241
  %v243 = vsel %vm116, %v240, 0.0
  %244 = vadd.xlane.f32.xlu0 %v243
  %v245 = vpop.xlane.xlu0 %244
  %v246 = vsel %vm116, %v242, 0.0
  %247 = vadd.xlane.f32.xlu0 %v246
  %v248 = vpop.xlane.xlu0 %247
  %v249 = vrcp.pop %v245
  %v250 = vmul.f32 %v240, %v249
  %v251 = vrcp.pop %v248
  %v252 = vmul.f32 %v242, %v251
  %253 = vst.msk [vmem:[%s3] sm:$0xff] %vm116, %v250
  %254 = vst.msk [vmem:[%s3 + $0x8] sm:$0xff] %vm116, %v252
  // Predicated region
  $region14: #{tpu_custom_call.1} parent=0 // pred_check
    _
  $region15: #{tpu_custom_call.1} parent=0 // pred_check_branch
    %256 = sbr.rel (0) target = $region17
  $region16: #{tpu_custom_call.1} parent=0 // pred_region
    _
  $region17: #{tpu_custom_call.1} parent=0 // pred_fallthru
    _
  // Predicated region
  $region18: #{tpu_custom_call.1} parent=0 // pred_check
    _
  $region19: #{tpu_custom_call.1} parent=0 // pred_check_branch
    %258 = sbr.rel (0) target = $region21
  $region20: #{tpu_custom_call.1} parent=0 // pred_region
    _
  $region21: #{tpu_custom_call.1} parent=0 // pred_fallthru
    _

</llo_original>
